<compile_context>
chip_gen: v5e
topology: v5e:2x2
jax: 0.10.0
libtpu: 0.0.40
codegen_flags: <defaults>
</compile_context>

<pallas_src>
import functools
import math

import jax
import jax.numpy as jnp
from jax import lax
from jax.experimental import pallas as pl
from jax.experimental.pallas import tpu as pltpu


def _round_up(n, m):
    return ((n + m - 1) // m) * m


# ----------------------------------------------------------------------------
# Fused forward kernel (one batch-row tile per grid step)
# ----------------------------------------------------------------------------
def _fused_vae_kernel(x_ref, w_ref, b_ref, out_ref, loss_ref, *,
                      dims, latent_dim, batch, tile_b, log_comp_level,
                      pack_pad):
    L = latent_dim

    def dense(h_bf16, li, act=False, to_bf16=False):
        # bf16 operands on the MXU, f32 accumulation; bias + LeakyReLU in f32
        # (v5e-safe), then a single cast to bf16 if it feeds another matmul.
        k, n, off = dims[li]                              # static ints
        y = jnp.dot(h_bf16, w_ref[0:k, off:off + n],
                    preferred_element_type=jnp.float32)
        y = y + b_ref[:, off:off + n]
        if act:
            y = jnp.maximum(y, 0.01 * y)                  # LeakyReLU(0.01)
        return y.astype(jnp.bfloat16) if to_bf16 else y

    # ----- Encoder (BN folded into weights, eval mode) -----
    x = x_ref[...]                                        # bf16 input tile
    h = dense(x, 0, act=True, to_bf16=True)
    h = dense(h, 1, act=True, to_bf16=True)
    h = dense(h, 2, act=True, to_bf16=True)
    heads = dense(h, 3)                                   # (tile_b, 2L) f32, fused mu|log_var
    mu = heads[:, :L]
    lv = heads[:, L:]

    # Row-validity mask for padded batch rows (keep them out of the losses).
    row = (pl.program_id(0) * tile_b
           + lax.broadcasted_iota(jnp.int32, (tile_b, 1), 0))
    valid = (row < batch).astype(jnp.float32)

    # ----- KL partial sum for this tile -----
    kl_sum = -0.5 * jnp.sum(valid * (1.0 + lv - mu * mu - jnp.exp(lv)))

    # ----- EntropyBottleneck (eval mode): z = mu -----
    eh = dense(mu.astype(jnp.bfloat16), 4, act=True, to_bf16=True)
    eheads = dense(eh, 5)                                 # fused e_mu | e_log_scale
    e_mu = eheads[:, :L]
    e_ls = eheads[:, L:] - log_comp_level
    zc = jnp.round(e_mu)                                  # deterministic quantization (eval)
    rate = 0.5 * (e_mu * e_mu + jnp.exp(2.0 * e_ls)) - e_ls - 0.5
    rate_sum = jnp.sum(valid * rate)

    # ----- Decoder (BN folded) -----
    d = dense(zc.astype(jnp.bfloat16), 6, act=True, to_bf16=True)
    d = dense(d, 7, act=True, to_bf16=True)
    d = dense(d, 8, act=True, to_bf16=True)
    rec = dense(d, 9)                                     # (tile_b, D) f32

    # ----- Single lane-dense packed output slab -----
    pieces = [mu, lv, zc, rec]
    if pack_pad > 0:
        pieces.append(jnp.zeros((tile_b, pack_pad), jnp.float32))
    out_ref[...] = jnp.concatenate(pieces, axis=1)

    # ----- One small loss-partials block per tile (kl -> lane 0, rate -> lane 1) -----
    lane = lax.broadcasted_iota(jnp.int32, (8, 128), 1)
    loss_ref[...] = jnp.where(lane == 0, kl_sum,
                              jnp.where(lane == 1, rate_sum, 0.0))


# ----------------------------------------------------------------------------
# Host wrapper
# ----------------------------------------------------------------------------
def _vae_forward(w_slab, b_slab, x, *, dims, latent_dim, log_comp_level):
    batch, input_dim = x.shape
    L, D = latent_dim, input_dim

    # tile_b: multiple of 16 (bf16 input tile), <=128 (v5e-friendly); split into
    # >=2 tiles when possible so the "parallel" axis can use both v7x TCs.
    tile_b = min(128, _round_up(batch, 16))
    b_pad = _round_up(batch, tile_b)
    if b_pad // tile_b < 2 and batch > 16:
        tile_b = _round_up((batch + 1) // 2, 16)
        b_pad = _round_up(batch, tile_b)
    num_tiles = b_pad // tile_b

    x = x.astype(jnp.bfloat16)
    if b_pad != batch:
        x = jnp.pad(x, ((0, b_pad - batch), (0, 0)))

    pack_w = _round_up(3 * L + D, 128)
    pack_pad = pack_w - (3 * L + D)

    kern = functools.partial(
        _fused_vae_kernel, dims=dims, latent_dim=L, batch=batch,
        tile_b=tile_b, log_comp_level=log_comp_level, pack_pad=pack_pad)

    flops = int(2 * b_pad * sum(k * n for k, n, _ in dims))
    transcendentals = int(b_pad * 2 * L)
    bytes_accessed = int(x.size * 2 + w_slab.size * 2 + b_slab.size * 4
                         + b_pad * pack_w * 4 + num_tiles * 8 * 128 * 4)

    packed, loss = pl.pallas_call(
        kern,
        out_shape=(jax.ShapeDtypeStruct((b_pad, pack_w), jnp.float32),
                   jax.ShapeDtypeStruct((num_tiles * 8, 128), jnp.float32)),
        grid=(num_tiles,),
        in_specs=[pl.BlockSpec((tile_b, D), lambda i: (i, 0)),
                  pl.BlockSpec(w_slab.shape, lambda i: (0, 0)),   # resident
                  pl.BlockSpec(b_slab.shape, lambda i: (0, 0))],  # resident
        out_specs=(pl.BlockSpec((tile_b, pack_w), lambda i: (i, 0)),
                   pl.BlockSpec((8, 128), lambda i: (i, 0))),
        compiler_params=pltpu.CompilerParams(
            dimension_semantics=("parallel",)),
        cost_estimate=pl.CostEstimate(flops=flops,
                                      transcendentals=transcendentals,
                                      bytes_accessed=bytes_accessed),
    )(x, w_slab, b_slab)

    mu = packed[:batch, 0:L]
    lv = packed[:batch, L:2 * L]
    zc = packed[:batch, 2 * L:3 * L]
    rec = packed[:batch, 3 * L:3 * L + D]
    loss = loss.reshape(num_tiles, 8, 128)
    kl_loss = loss[:, 0, 0].sum() / batch
    comp_loss = loss[:, 0, 1].sum() / (batch * L)

    return {"mu": mu, "log_var": lv, "z": mu, "z_compressed": zc,
            "reconstruction": rec, "kl_loss": kl_loss,
            "compression_loss": comp_loss}


# ----------------------------------------------------------------------------
# Parameter construction (PyTorch nn.Linear-style init, eval BN folded in)
# ----------------------------------------------------------------------------
class MeaningVAEPallas:
    """JAX/Pallas reimplementation of MeaningVAE (tensor path, eval mode)."""

    ENC_HIDDEN = (256, 128, 64)

    def __init__(self, input_dim, latent_dim, compression_level=1.0,
                 use_batch_norm=True, seed=0):
        self.input_dim = input_dim
        self.latent_dim = latent_dim
        self.compression_level = float(compression_level)
        self.use_batch_norm = use_batch_norm
        self.log_comp_level = float(math.log(self.compression_level))

        key = jax.random.PRNGKey(seed)
        keys = iter(jax.random.split(key, 32))
        # Fresh BatchNorm1d in eval mode: gamma=1, beta=0, mean=0, var=1.
        bn_scale = 1.0 / math.sqrt(1.0 + 1e-5) if use_batch_norm else 1.0

        def lin(fan_in, fan_out, bn=False):
            kw, kb = jax.random.split(next(keys))
            bound = 1.0 / math.sqrt(fan_in)
            w = jax.random.uniform(kw, (fan_in, fan_out), jnp.float32,
                                   -bound, bound)
            b = jax.random.uniform(kb, (1, fan_out), jnp.float32,
                                   -bound, bound)
            if bn:                              # fold eval BN into the linear
                w = w * bn_scale
                b = b * bn_scale
            return w, b

        L = latent_dim
        layers = []
        d = input_dim
        for h in self.ENC_HIDDEN:               # encoder MLP (BN folded)
            layers.append(lin(d, h, bn=use_batch_norm)); d = h
        wmu, bmu = lin(d, L)                    # fc_mu
        wvar, bvar = lin(d, L)                  # fc_var
        layers.append((jnp.concatenate([wmu, wvar], axis=1),
                       jnp.concatenate([bmu, bvar], axis=1)))   # fused heads
        layers.append(lin(L, 2 * L))            # EB projection layer 1
        ewm, ebm = lin(2 * L, L)                # EB -> mu head
        ews, ebs = lin(2 * L, L)                # EB -> log_scale head
        layers.append((jnp.concatenate([ewm, ews], axis=1),
                       jnp.concatenate([ebm, ebs], axis=1)))    # fused EB heads
        d = L
        for h in reversed(self.ENC_HIDDEN):     # decoder MLP (BN folded)
            layers.append(lin(d, h, bn=use_batch_norm)); d = h
        layers.append(lin(d, input_dim))        # decoder output

        # Per-layer bf16 params kept around for the pure-JAX reference.
        self.layer_params = tuple((w.astype(jnp.bfloat16), b) for w, b in layers)

        # Pack all layers into one bf16 weight slab + one f32 bias slab with
        # 128-aligned static column offsets (3 kernel operands total).
        max_k = max(w.shape[0] for w, _ in layers)
        w_cols, b_cols, dims, off = [], [], [], 0
        for w, b in layers:
            k, n = w.shape
            n_pad = _round_up(n, 128)
            w_cols.append(jnp.zeros((max_k, n_pad), jnp.float32)
                          .at[:k, :n].set(w))
            b_cols.append(jnp.zeros((1, n_pad), jnp.float32)
                          .at[:, :n].set(b))
            dims.append((k, n, off))
            off += n_pad
        self.w_slab = jnp.concatenate(w_cols, axis=1).astype(jnp.bfloat16)
        self.b_slab = jnp.concatenate(b_cols, axis=1)
        self.dims = tuple(dims)

        self._fwd = jax.jit(functools.partial(
            _vae_forward, dims=self.dims, latent_dim=latent_dim,
            log_comp_level=self.log_comp_level))

    def forward(self, x):
        assert x.ndim == 2 and x.shape[1] == self.input_dim
        return self._fwd(self.w_slab, self.b_slab, x)


# ----------------------------------------------------------------------------
# Pure-JAX reference (same bf16-weight / bf16-activation / f32-accumulate path)
# ----------------------------------------------------------------------------
def _vae_reference(layer_params, x, log_comp_level, latent_dim):
    L = latent_dim

    def dense(h_bf16, p, act=False, to_bf16=False):
        w, b = p
        y = jnp.dot(h_bf16, w, preferred_element_type=jnp.float32) + b
        if act:
            y = jnp.maximum(y, 0.01 * y)
        return y.astype(jnp.bfloat16) if to_bf16 else y

    B = x.shape[0]
    h = dense(x.astype(jnp.bfloat16), layer_params[0], True, True)
    h = dense(h, layer_params[1], True, True)
    h = dense(h, layer_params[2], True, True)
    heads = dense(h, layer_params[3])
    mu, lv = heads[:, :L], heads[:, L:]
    kl = -0.5 * jnp.sum(1.0 + lv - mu * mu - jnp.exp(lv)) / B
    eh = dense(mu.astype(jnp.bfloat16), layer_params[4], True, True)
    eheads = dense(eh, layer_params[5])
    e_mu, e_ls = eheads[:, :L], eheads[:, L:] - log_comp_level
    zc = jnp.round(e_mu)
    rate = 0.5 * (e_mu * e_mu + jnp.exp(2.0 * e_ls)) - e_ls - 0.5
    cp = jnp.sum(rate) / (B * L)
    d = dense(zc.astype(jnp.bfloat16), layer_params[6], True, True)
    d = dense(d, layer_params[7], True, True)
    d = dense(d, layer_params[8], True, True)
    rec = dense(d, layer_params[9])
    return {"mu": mu, "log_var": lv, "z": mu, "z_compressed": zc,
            "reconstruction": rec, "kl_loss": kl, "compression_loss": cp}


# ----------------------------------------------------------------------------
if __name__ == "__main__":
    BATCH, INPUT_DIM, LATENT_DIM = 32, 32, 8

    model = MeaningVAEPallas(input_dim=INPUT_DIM, latent_dim=LATENT_DIM,
                             compression_level=1.0, use_batch_norm=True, seed=0)

    x = jax.random.normal(jax.random.PRNGKey(0), (BATCH, INPUT_DIM), jnp.float32)

    results = model.forward(x)
    results = jax.tree_util.tree_map(jax.block_until_ready, results)

    # Shape checks.
    assert results["mu"].shape == (BATCH, LATENT_DIM)
    assert results["log_var"].shape == (BATCH, LATENT_DIM)
    assert results["z"].shape == (BATCH, LATENT_DIM)
    assert results["z_compressed"].shape == (BATCH, LATENT_DIM)
    assert results["reconstruction"].shape == (BATCH, INPUT_DIM)
    assert results["kl_loss"].shape == ()
    assert results["compression_loss"].shape == ()

    # Numeric check against the pure-JAX reference (same bf16/f32 math path).
    ref = _vae_reference(model.layer_params, x, model.log_comp_level, LATENT_DIM)
    assert jnp.allclose(results["mu"], ref["mu"], atol=1e-2, rtol=1e-2)
    assert jnp.allclose(results["log_var"], ref["log_var"], atol=1e-2, rtol=1e-2)
    assert jnp.allclose(results["kl_loss"], ref["kl_loss"], atol=1e-2, rtol=1e-2)
    assert jnp.allclose(results["compression_loss"], ref["compression_loss"],
                        atol=1e-2, rtol=1e-2)
    # Rounding-sensitive outputs: use a mean-abs criterion (robust to a single
    # half-way rounding flip).
    assert jnp.mean(jnp.abs(results["z_compressed"] - ref["z_compressed"])) < 0.05
    assert jnp.mean(jnp.abs(results["reconstruction"] - ref["reconstruction"])) < 0.05
    assert all(bool(jnp.all(jnp.isfinite(v))) for v in results.values())

    print("KERNEL_OK")
</pallas_src>

<mosaic_0001>
module attributes {stable_mosaic.version = 11 : i64} {
  func.func @_fused_vae_kernel(%arg0: i32, %arg1: memref<16x32xbf16, #tpu.memory_space<vmem>>, %arg2: memref<256x1536xbf16, #tpu.memory_space<vmem>>, %arg3: memref<1x1536xf32, #tpu.memory_space<vmem>>, %arg4: memref<16x128xf32, #tpu.memory_space<vmem>>, %arg5: memref<8x128xf32, #tpu.memory_space<vmem>>) attributes {dimension_semantics = [#tpu.dimension_semantics<parallel>], iteration_bounds = array<i64: 2>, scalar_prefetch = 0 : i64, scratch_operands = 0 : i64, tpu.core_type = #tpu.core_type<tc>, window_params = [{transform_indices = @transform_0, window_bounds = array<i64: 16, 32>}, {pipeline_mode = #tpu.pipeline_mode<synchronous>, transform_indices = @transform_1, window_bounds = array<i64: 256, 1536>}, {pipeline_mode = #tpu.pipeline_mode<synchronous>, transform_indices = @transform_2, window_bounds = array<i64: 1, 1536>}, {transform_indices = @transform_3, window_bounds = array<i64: 16, 128>}, {transform_indices = @transform_4, window_bounds = array<i64: 8, 128>}]} {
    %c0 = arith.constant 0 : index
    %c0_0 = arith.constant 0 : index
    %0 = vector.load %arg1[%c0, %c0_0] : memref<16x32xbf16, #tpu.memory_space<vmem>>, vector<16x32xbf16>
    %c0_1 = arith.constant 0 : index
    %c0_2 = arith.constant 0 : index
    %1 = vector.load %arg2[%c0_1, %c0_2] : memref<256x1536xbf16, #tpu.memory_space<vmem>>, vector<32x256xbf16>
    %cst = arith.constant dense<0.000000e+00> : vector<16x256xf32>
    %2 = tpu.matmul %0, %1, %cst {dimension_numbers = #tpu.dot_dimension_numbers<[1], [0], [0], [1], [0, 0, 1, 1], [], []>} : vector<16x32xbf16>, vector<32x256xbf16>, vector<16x256xf32> -> vector<16x256xf32>
    %c0_3 = arith.constant 0 : index
    %c0_4 = arith.constant 0 : index
    %3 = vector.load %arg3[%c0_3, %c0_4] : memref<1x1536xf32, #tpu.memory_space<vmem>>, vector<1x256xf32>
    %4 = vector.broadcast %3 : vector<1x256xf32> to vector<16x256xf32>
    %5 = arith.addf %2, %4 : vector<16x256xf32>
    %cst_5 = arith.constant 0.00999999977 : f32
    %6 = vector.broadcast %cst_5 : f32 to vector<16x256xf32>
    %7 = arith.mulf %6, %5 : vector<16x256xf32>
    %8 = arith.maximumf %5, %7 : vector<16x256xf32>
    %9 = arith.truncf %8 : vector<16x256xf32> to vector<16x256xbf16>
    %c0_6 = arith.constant 0 : index
    %c256 = arith.constant 256 : index
    %10 = vector.load %arg2[%c0_6, %c256] : memref<256x1536xbf16, #tpu.memory_space<vmem>>, vector<256x128xbf16>
    %cst_7 = arith.constant dense<0.000000e+00> : vector<16x128xf32>
    %11 = tpu.matmul %9, %10, %cst_7 {dimension_numbers = #tpu.dot_dimension_numbers<[1], [0], [0], [1], [0, 0, 1, 1], [], []>} : vector<16x256xbf16>, vector<256x128xbf16>, vector<16x128xf32> -> vector<16x128xf32>
    %c0_8 = arith.constant 0 : index
    %c256_9 = arith.constant 256 : index
    %12 = vector.load %arg3[%c0_8, %c256_9] : memref<1x1536xf32, #tpu.memory_space<vmem>>, vector<1x128xf32>
    %13 = vector.broadcast %12 : vector<1x128xf32> to vector<16x128xf32>
    %14 = arith.addf %11, %13 : vector<16x128xf32>
    %cst_10 = arith.constant 0.00999999977 : f32
    %15 = vector.broadcast %cst_10 : f32 to vector<16x128xf32>
    %16 = arith.mulf %15, %14 : vector<16x128xf32>
    %17 = arith.maximumf %14, %16 : vector<16x128xf32>
    %18 = arith.truncf %17 : vector<16x128xf32> to vector<16x128xbf16>
    %c0_11 = arith.constant 0 : index
    %c384 = arith.constant 384 : index
    %19 = vector.load %arg2[%c0_11, %c384] : memref<256x1536xbf16, #tpu.memory_space<vmem>>, vector<128x64xbf16>
    %cst_12 = arith.constant dense<0.000000e+00> : vector<16x64xf32>
    %20 = tpu.matmul %18, %19, %cst_12 {dimension_numbers = #tpu.dot_dimension_numbers<[1], [0], [0], [1], [0, 0, 1, 1], [], []>} : vector<16x128xbf16>, vector<128x64xbf16>, vector<16x64xf32> -> vector<16x64xf32>
    %c0_13 = arith.constant 0 : index
    %c384_14 = arith.constant 384 : index
    %21 = vector.load %arg3[%c0_13, %c384_14] : memref<1x1536xf32, #tpu.memory_space<vmem>>, vector<1x64xf32>
    %22 = vector.broadcast %21 : vector<1x64xf32> to vector<16x64xf32>
    %23 = arith.addf %20, %22 : vector<16x64xf32>
    %cst_15 = arith.constant 0.00999999977 : f32
    %24 = vector.broadcast %cst_15 : f32 to vector<16x64xf32>
    %25 = arith.mulf %24, %23 : vector<16x64xf32>
    %26 = arith.maximumf %23, %25 : vector<16x64xf32>
    %27 = arith.truncf %26 : vector<16x64xf32> to vector<16x64xbf16>
    %c0_16 = arith.constant 0 : index
    %c512 = arith.constant 512 : index
    %28 = vector.load %arg2[%c0_16, %c512] : memref<256x1536xbf16, #tpu.memory_space<vmem>>, vector<64x16xbf16>
    %cst_17 = arith.constant dense<0.000000e+00> : vector<16x16xf32>
    %29 = tpu.matmul %27, %28, %cst_17 {dimension_numbers = #tpu.dot_dimension_numbers<[1], [0], [0], [1], [0, 0, 1, 1], [], []>} : vector<16x64xbf16>, vector<64x16xbf16>, vector<16x16xf32> -> vector<16x16xf32>
    %c0_18 = arith.constant 0 : index
    %c512_19 = arith.constant 512 : index
    %30 = vector.load %arg3[%c0_18, %c512_19] : memref<1x1536xf32, #tpu.memory_space<vmem>>, vector<1x16xf32>
    %31 = vector.broadcast %30 : vector<1x16xf32> to vector<16x16xf32>
    %32 = arith.addf %29, %31 : vector<16x16xf32>
    %33 = vector.extract_strided_slice %32 {offsets = [0, 0], sizes = [16, 8], strides = [1, 1]} : vector<16x16xf32> to vector<16x8xf32>
    %34 = vector.extract_strided_slice %32 {offsets = [0, 8], sizes = [16, 8], strides = [1, 1]} : vector<16x16xf32> to vector<16x8xf32>
    %c16_i32 = arith.constant 16 : i32
    %35 = arith.muli %arg0, %c16_i32 : i32
    %36 = tpu.iota {dimensions = array<i32: 0>} : vector<16x1xi32>
    %37 = vector.broadcast %35 : i32 to vector<16x1xi32>
    %38 = arith.addi %37, %36 : vector<16x1xi32>
    %c32_i32 = arith.constant 32 : i32
    %39 = vector.broadcast %c32_i32 : i32 to vector<16x1xi32>
    %40 = arith.cmpi slt, %38, %39 : vector<16x1xi32>
    %41 = arith.extui %40 : vector<16x1xi1> to vector<16x1xi32>
    %42 = arith.sitofp %41 : vector<16x1xi32> to vector<16x1xf32>
    %cst_20 = arith.constant 1.000000e+00 : f32
    %43 = vector.broadcast %cst_20 : f32 to vector<16x8xf32>
    %44 = arith.addf %43, %34 : vector<16x8xf32>
    %45 = arith.mulf %33, %33 : vector<16x8xf32>
    %46 = arith.subf %44, %45 : vector<16x8xf32>
    %47 = math.exp %34 : vector<16x8xf32>
    %48 = arith.subf %46, %47 : vector<16x8xf32>
    %49 = vector.broadcast %42 : vector<16x1xf32> to vector<16x8xf32>
    %50 = arith.mulf %49, %48 : vector<16x8xf32>
    %51 = vector.shape_cast %50 : vector<16x8xf32> to vector<1x16x8xf32>
    %cst_21 = arith.constant dense<0.000000e+00> : vector<1xf32>
    %52 = vector.multi_reduction <add>, %51, %cst_21 [1, 2] : vector<1x16x8xf32> to vector<1xf32>
    %53 = vector.shape_cast %52 : vector<1xf32> to vector<1x1x1xf32>
    %54 = vector.extract %53[0, 0, 0] : f32 from vector<1x1x1xf32>
    %cst_22 = arith.constant -5.000000e-01 : f32
    %55 = arith.mulf %cst_22, %54 : f32
    %56 = arith.truncf %33 : vector<16x8xf32> to vector<16x8xbf16>
    %c0_23 = arith.constant 0 : index
    %c640 = arith.constant 640 : index
    %57 = vector.load %arg2[%c0_23, %c640] : memref<256x1536xbf16, #tpu.memory_space<vmem>>, vector<8x16xbf16>
    %cst_24 = arith.constant dense<0.000000e+00> : vector<16x16xf32>
    %58 = tpu.matmul %56, %57, %cst_24 {dimension_numbers = #tpu.dot_dimension_numbers<[1], [0], [0], [1], [0, 0, 1, 1], [], []>} : vector<16x8xbf16>, vector<8x16xbf16>, vector<16x16xf32> -> vector<16x16xf32>
    %c0_25 = arith.constant 0 : index
    %c640_26 = arith.constant 640 : index
    %59 = vector.load %arg3[%c0_25, %c640_26] : memref<1x1536xf32, #tpu.memory_space<vmem>>, vector<1x16xf32>
    %60 = vector.broadcast %59 : vector<1x16xf32> to vector<16x16xf32>
    %61 = arith.addf %58, %60 : vector<16x16xf32>
    %cst_27 = arith.constant 0.00999999977 : f32
    %62 = vector.broadcast %cst_27 : f32 to vector<16x16xf32>
    %63 = arith.mulf %62, %61 : vector<16x16xf32>
    %64 = arith.maximumf %61, %63 : vector<16x16xf32>
    %65 = arith.truncf %64 : vector<16x16xf32> to vector<16x16xbf16>
    %c0_28 = arith.constant 0 : index
    %c768 = arith.constant 768 : index
    %66 = vector.load %arg2[%c0_28, %c768] : memref<256x1536xbf16, #tpu.memory_space<vmem>>, vector<16x16xbf16>
    %cst_29 = arith.constant dense<0.000000e+00> : vector<16x16xf32>
    %67 = tpu.matmul %65, %66, %cst_29 {dimension_numbers = #tpu.dot_dimension_numbers<[1], [0], [0], [1], [0, 0, 1, 1], [], []>} : vector<16x16xbf16>, vector<16x16xbf16>, vector<16x16xf32> -> vector<16x16xf32>
    %c0_30 = arith.constant 0 : index
    %c768_31 = arith.constant 768 : index
    %68 = vector.load %arg3[%c0_30, %c768_31] : memref<1x1536xf32, #tpu.memory_space<vmem>>, vector<1x16xf32>
    %69 = vector.broadcast %68 : vector<1x16xf32> to vector<16x16xf32>
    %70 = arith.addf %67, %69 : vector<16x16xf32>
    %71 = vector.extract_strided_slice %70 {offsets = [0, 0], sizes = [16, 8], strides = [1, 1]} : vector<16x16xf32> to vector<16x8xf32>
    %72 = vector.extract_strided_slice %70 {offsets = [0, 8], sizes = [16, 8], strides = [1, 1]} : vector<16x16xf32> to vector<16x8xf32>
    %cst_32 = arith.constant 0.000000e+00 : f32
    %73 = vector.broadcast %cst_32 : f32 to vector<16x8xf32>
    %74 = arith.subf %72, %73 : vector<16x8xf32>
    %75 = math.roundeven %71 : vector<16x8xf32>
    %76 = arith.mulf %71, %71 : vector<16x8xf32>
    %cst_33 = arith.constant 2.000000e+00 : f32
    %77 = vector.broadcast %cst_33 : f32 to vector<16x8xf32>
    %78 = arith.mulf %77, %74 : vector<16x8xf32>
    %79 = math.exp %78 : vector<16x8xf32>
    %80 = arith.addf %76, %79 : vector<16x8xf32>
    %cst_34 = arith.constant 5.000000e-01 : f32
    %81 = vector.broadcast %cst_34 : f32 to vector<16x8xf32>
    %82 = arith.mulf %81, %80 : vector<16x8xf32>
    %83 = arith.subf %82, %74 : vector<16x8xf32>
    %cst_35 = arith.constant 5.000000e-01 : f32
    %84 = vector.broadcast %cst_35 : f32 to vector<16x8xf32>
    %85 = arith.subf %83, %84 : vector<16x8xf32>
    %86 = vector.broadcast %42 : vector<16x1xf32> to vector<16x8xf32>
    %87 = arith.mulf %86, %85 : vector<16x8xf32>
    %88 = vector.shape_cast %87 : vector<16x8xf32> to vector<1x16x8xf32>
    %cst_36 = arith.constant dense<0.000000e+00> : vector<1xf32>
    %89 = vector.multi_reduction <add>, %88, %cst_36 [1, 2] : vector<1x16x8xf32> to vector<1xf32>
    %90 = vector.shape_cast %89 : vector<1xf32> to vector<1x1x1xf32>
    %91 = vector.extract %90[0, 0, 0] : f32 from vector<1x1x1xf32>
    %92 = arith.truncf %75 : vector<16x8xf32> to vector<16x8xbf16>
    %c0_37 = arith.constant 0 : index
    %c896 = arith.constant 896 : index
    %93 = vector.load %arg2[%c0_37, %c896] : memref<256x1536xbf16, #tpu.memory_space<vmem>>, vector<8x64xbf16>
    %cst_38 = arith.constant dense<0.000000e+00> : vector<16x64xf32>
    %94 = tpu.matmul %92, %93, %cst_38 {dimension_numbers = #tpu.dot_dimension_numbers<[1], [0], [0], [1], [0, 0, 1, 1], [], []>} : vector<16x8xbf16>, vector<8x64xbf16>, vector<16x64xf32> -> vector<16x64xf32>
    %c0_39 = arith.constant 0 : index
    %c896_40 = arith.constant 896 : index
    %95 = vector.load %arg3[%c0_39, %c896_40] : memref<1x1536xf32, #tpu.memory_space<vmem>>, vector<1x64xf32>
    %96 = vector.broadcast %95 : vector<1x64xf32> to vector<16x64xf32>
    %97 = arith.addf %94, %96 : vector<16x64xf32>
    %cst_41 = arith.constant 0.00999999977 : f32
    %98 = vector.broadcast %cst_41 : f32 to vector<16x64xf32>
    %99 = arith.mulf %98, %97 : vector<16x64xf32>
    %100 = arith.maximumf %97, %99 : vector<16x64xf32>
    %101 = arith.truncf %100 : vector<16x64xf32> to vector<16x64xbf16>
    %c0_42 = arith.constant 0 : index
    %c1024 = arith.constant 1024 : index
    %102 = vector.load %arg2[%c0_42, %c1024] : memref<256x1536xbf16, #tpu.memory_space<vmem>>, vector<64x128xbf16>
    %cst_43 = arith.constant dense<0.000000e+00> : vector<16x128xf32>
    %103 = tpu.matmul %101, %102, %cst_43 {dimension_numbers = #tpu.dot_dimension_numbers<[1], [0], [0], [1], [0, 0, 1, 1], [], []>} : vector<16x64xbf16>, vector<64x128xbf16>, vector<16x128xf32> -> vector<16x128xf32>
    %c0_44 = arith.constant 0 : index
    %c1024_45 = arith.constant 1024 : index
    %104 = vector.load %arg3[%c0_44, %c1024_45] : memref<1x1536xf32, #tpu.memory_space<vmem>>, vector<1x128xf32>
    %105 = vector.broadcast %104 : vector<1x128xf32> to vector<16x128xf32>
    %106 = arith.addf %103, %105 : vector<16x128xf32>
    %cst_46 = arith.constant 0.00999999977 : f32
    %107 = vector.broadcast %cst_46 : f32 to vector<16x128xf32>
    %108 = arith.mulf %107, %106 : vector<16x128xf32>
    %109 = arith.maximumf %106, %108 : vector<16x128xf32>
    %110 = arith.truncf %109 : vector<16x128xf32> to vector<16x128xbf16>
    %c0_47 = arith.constant 0 : index
    %c1152 = arith.constant 1152 : index
    %111 = vector.load %arg2[%c0_47, %c1152] : memref<256x1536xbf16, #tpu.memory_space<vmem>>, vector<128x256xbf16>
    %cst_48 = arith.constant dense<0.000000e+00> : vector<16x256xf32>
    %112 = tpu.matmul %110, %111, %cst_48 {dimension_numbers = #tpu.dot_dimension_numbers<[1], [0], [0], [1], [0, 0, 1, 1], [], []>} : vector<16x128xbf16>, vector<128x256xbf16>, vector<16x256xf32> -> vector<16x256xf32>
    %c0_49 = arith.constant 0 : index
    %c1152_50 = arith.constant 1152 : index
    %113 = vector.load %arg3[%c0_49, %c1152_50] : memref<1x1536xf32, #tpu.memory_space<vmem>>, vector<1x256xf32>
    %114 = vector.broadcast %113 : vector<1x256xf32> to vector<16x256xf32>
    %115 = arith.addf %112, %114 : vector<16x256xf32>
    %cst_51 = arith.constant 0.00999999977 : f32
    %116 = vector.broadcast %cst_51 : f32 to vector<16x256xf32>
    %117 = arith.mulf %116, %115 : vector<16x256xf32>
    %118 = arith.maximumf %115, %117 : vector<16x256xf32>
    %119 = arith.truncf %118 : vector<16x256xf32> to vector<16x256xbf16>
    %c0_52 = arith.constant 0 : index
    %c1408 = arith.constant 1408 : index
    %120 = vector.load %arg2[%c0_52, %c1408] : memref<256x1536xbf16, #tpu.memory_space<vmem>>, vector<256x32xbf16>
    %cst_53 = arith.constant dense<0.000000e+00> : vector<16x32xf32>
    %121 = tpu.matmul %119, %120, %cst_53 {dimension_numbers = #tpu.dot_dimension_numbers<[1], [0], [0], [1], [0, 0, 1, 1], [], []>} : vector<16x256xbf16>, vector<256x32xbf16>, vector<16x32xf32> -> vector<16x32xf32>
    %c0_54 = arith.constant 0 : index
    %c1408_55 = arith.constant 1408 : index
    %122 = vector.load %arg3[%c0_54, %c1408_55] : memref<1x1536xf32, #tpu.memory_space<vmem>>, vector<1x32xf32>
    %123 = vector.broadcast %122 : vector<1x32xf32> to vector<16x32xf32>
    %124 = arith.addf %121, %123 : vector<16x32xf32>
    %cst_56 = arith.constant 0.000000e+00 : f32
    %125 = vector.broadcast %cst_56 : f32 to vector<16x72xf32>
    %126 = tpu.concatenate %33, %34, %75, %124, %125 in 1 : vector<16x8xf32>, vector<16x8xf32>, vector<16x8xf32>, vector<16x32xf32>, vector<16x72xf32> -> vector<16x128xf32>
    %c0_57 = arith.constant 0 : index
    %c0_58 = arith.constant 0 : index
    %127 = vector.load %arg4[%c0_57, %c0_58] : memref<16x128xf32, #tpu.memory_space<vmem>>, vector<16x128xf32>
    tpu.vector_store %arg4[%c0_57, %c0_58], %126 {strides = array<i32>} : memref<16x128xf32, #tpu.memory_space<vmem>>, vector<16x128xf32>,
    %128 = tpu.iota {dimensions = array<i32: 1>} : vector<8x128xi32>
    %c0_i32 = arith.constant 0 : i32
    %129 = vector.broadcast %c0_i32 : i32 to vector<8x128xi32>
    %130 = arith.cmpi eq, %128, %129 : vector<8x128xi32>
    %c1_i32 = arith.constant 1 : i32
    %131 = vector.broadcast %c1_i32 : i32 to vector<8x128xi32>
    %132 = arith.cmpi eq, %128, %131 : vector<8x128xi32>
    %cst_59 = arith.constant 0.000000e+00 : f32
    %133 = vector.broadcast %91 : f32 to vector<8x128xf32>
    %134 = vector.broadcast %cst_59 : f32 to vector<8x128xf32>
    %135 = arith.select %132, %133, %134 : vector<8x128xi1>, vector<8x128xf32>
    %136 = vector.broadcast %55 : f32 to vector<8x128xf32>
    %137 = arith.select %130, %136, %135 : vector<8x128xi1>, vector<8x128xf32>
    %c0_60 = arith.constant 0 : index
    %c0_61 = arith.constant 0 : index
    %138 = vector.load %arg5[%c0_60, %c0_61] : memref<8x128xf32, #tpu.memory_space<vmem>>, vector<8x128xf32>
    tpu.vector_store %arg5[%c0_60, %c0_61], %137 {strides = array<i32>} : memref<8x128xf32, #tpu.memory_space<vmem>>, vector<8x128xf32>,
    return
  }
  func.func @transform_0(%arg0: i32) -> (i32, i32) {
    %c0_i32 = arith.constant 0 : i32
    %c0_i32_0 = arith.constant 0 : i32
    return %arg0, %c0_i32 : i32, i32
  }
  func.func @transform_1(%arg0: i32) -> (i32, i32) {
    %c0_i32 = arith.constant 0 : i32
    %c0_i32_0 = arith.constant 0 : i32
    %c0_i32_1 = arith.constant 0 : i32
    return %c0_i32, %c0_i32_0 : i32, i32
  }
  func.func @transform_2(%arg0: i32) -> (i32, i32) {
    %c0_i32 = arith.constant 0 : i32
    %c0_i32_0 = arith.constant 0 : i32
    %c0_i32_1 = arith.constant 0 : i32
    return %c0_i32, %c0_i32_0 : i32, i32
  }
  func.func @transform_3(%arg0: i32) -> (i32, i32) {
    %c0_i32 = arith.constant 0 : i32
    %c0_i32_0 = arith.constant 0 : i32
    return %arg0, %c0_i32 : i32, i32
  }
  func.func @transform_4(%arg0: i32) -> (i32, i32) {
    %c0_i32 = arith.constant 0 : i32
    %c0_i32_0 = arith.constant 0 : i32
    return %arg0, %c0_i32 : i32, i32
  }
}

</mosaic_0001>

<llo_original>
// kernel: _vae_forward.1
$region0: #{_vae_forward.1}
  #allocation0 [shape = 'u32[]', space=smem, size = 0x4, offset = 0x4, fixed_abs, tag = 'smem constant byte address 0x4 - core index']
  #allocation1 [shape = 'u32[72,128]{1,0:T(1,128)}', space=vmem, size = 0x9000, scoped, tag = 'internal scratch']
  %s0 = inlined_call_operand.vmem [shape: bf16[32,32], index: 0, kind: input, shape index: {}]
  %s1 = inlined_call_operand.hbm [shape: bf16[256,1536], index: 1, kind: input, shape index: {}]
  %s2 = inlined_call_operand.vmem [shape: f32[1,1536], index: 2, kind: input, shape index: {}]
  %s3 = inlined_call_operand.vmem [shape: f32[32,128], index: 3, kind: output, shape index: {0}]
  %s4 = inlined_call_operand.vmem [shape: f32[16,128], index: 4, kind: output, shape index: {1}]
  %5 = xla_tuple %s3, %s4
  %s6 = sld [smem:[#allocation0]]
  $region57: #{_vae_forward.1} parent=0
    _
  %s8 = ssub.s32 1, %s6
  %s9 = scalar_select 0, %s8, %s6
  $region1: #{_vae_forward.1} parent=0
    #allocation2 [shape = 'u8[786432]{0}', space=vmem, size = 0xc0000, scoped, tag = 'input window, operand 1, single buffered']
    #allocation3 [shape = 's32[2]{0}', space=sflag, size = 0x8, scoped, tag = 'scoped memory for _vae_forward.1']
    %10 = vsyncpa [#allocation3], 0
    loop: start=0, step=1, limit=4
    $region2: #{_vae_forward.1} parent=1 // loop_pre_header
      _
    $region3: #{_vae_forward.1} parent=1 // loop_header
      %s12 = sphi 0, %s16
      %p13 = scmp.ge.s32.totalorder %s12, 4
      %s22 = sphi 0, %s24
      %s25 = sphi 0, %s22
      %s26 = sphi 0, %s25
      %s42 = sphi 0, %s26
      %s46 = sphi 0, %s46
      %s48 = sphi 0, %s46
      %s49 = sphi 0, %s48
      %s63 = sphi 0, %s49
      %s67 = sphi 0, %s67
      %s69 = sphi 0, %s67
      %s70 = sphi 0, %s69
      %s84 = sphi 0, %s70
      %s90 = sphi 0, %s92
      %s93 = sphi 0, %s90
      %s94 = sphi 0, %s93
      %s110 = sphi 0, %s94
      %s116 = sphi 0, %s118
      %s119 = sphi 0, %s116
      %s120 = sphi 0, %s119
      %s136 = sphi 0, %s120
    $region4: #{_vae_forward.1} parent=1 // loop_header_branch
      %15 = sbr.rel (%p13) target = $region8
    $region5: #{_vae_forward.1} parent=1 // loop_body
      %s17 = ssub.s32 %s12, 1
      %s18 = ssub.s32 %s12, 2
      %s19 = sadd.s32 %s12, 1
      %s20 = ssub.s32 %s12, %s19
      %p21 = scmp.eq.s32.totalorder %s20, 0
      %s23 = sadd.s32 %s22, 1
      %s24 = scalar_select %p21, %s22, %s23
      %p27 = pneg %p21
      %p28 = scmp.eq.s32.totalorder %s12, 1
      %p29 = por %p27, %p28
      %p30 = scmp.ne.s32.totalorder %s22, %s25
      %p31 = scmp.eq.s32.totalorder %s12, 0
      %p32 = por %p30, %p31
      %p33 = scmp.ne.s32.totalorder %s22, %s25
      %p34 = scmp.eq.s32.totalorder %s17, 1
      %p35 = por %p33, %p34
      %p36 = scmp.ne.s32.totalorder %s25, %s26
      %p37 = scmp.eq.s32.totalorder %s17, 0
      %p38 = por %p36, %p37
      %p39 = scmp.ne.s32.totalorder %s25, %s26
      %p40 = scmp.eq.s32.totalorder %s18, 1
      %p41 = por %p39, %p40
      %p43 = scmp.ne.s32.totalorder %s26, %s42
      %p44 = scmp.eq.s32.totalorder %s18, 0
      %p45 = por %p43, %p44
      %s47 = sadd.s32 %s46, 1
      %p50 = scmp.eq.s32.totalorder %s12, 1
      %p51 = scmp.ne.s32.totalorder %s46, %s48
      %p52 = scmp.eq.s32.totalorder %s12, 0
      %p53 = por %p51, %p52
      %p54 = scmp.ne.s32.totalorder %s46, %s48
      %p55 = scmp.eq.s32.totalorder %s17, 1
      %p56 = por %p54, %p55
      %p57 = scmp.ne.s32.totalorder %s48, %s49
      %p58 = scmp.eq.s32.totalorder %s17, 0
      %p59 = por %p57, %p58
      %p60 = scmp.ne.s32.totalorder %s48, %s49
      %p61 = scmp.eq.s32.totalorder %s18, 1
      %p62 = por %p60, %p61
      %p64 = scmp.ne.s32.totalorder %s49, %s63
      %p65 = scmp.eq.s32.totalorder %s18, 0
      %p66 = por %p64, %p65
      %s68 = sadd.s32 %s67, 1
      %p71 = scmp.eq.s32.totalorder %s12, 1
      %p72 = scmp.ne.s32.totalorder %s67, %s69
      %p73 = scmp.eq.s32.totalorder %s12, 0
      %p74 = por %p72, %p73
      %p75 = scmp.ne.s32.totalorder %s67, %s69
      %p76 = scmp.eq.s32.totalorder %s17, 1
      %p77 = por %p75, %p76
      %p78 = scmp.ne.s32.totalorder %s69, %s70
      %p79 = scmp.eq.s32.totalorder %s17, 0
      %p80 = por %p78, %p79
      %p81 = scmp.ne.s32.totalorder %s69, %s70
      %p82 = scmp.eq.s32.totalorder %s18, 1
      %p83 = por %p81, %p82
      %p85 = scmp.ne.s32.totalorder %s70, %s84
      %p86 = scmp.eq.s32.totalorder %s18, 0
      %p87 = por %p85, %p86
      %s88 = ssub.s32 %s12, %s19
      %p89 = scmp.eq.s32.totalorder %s88, 0
      %s91 = sadd.s32 %s90, 1
      %s92 = scalar_select %p89, %s90, %s91
      %p95 = pneg %p89
      %p96 = scmp.eq.s32.totalorder %s12, 1
      %p97 = por %p95, %p96
      %p98 = scmp.ne.s32.totalorder %s90, %s93
      %p99 = scmp.eq.s32.totalorder %s12, 0
      %p100 = por %p98, %p99
      %p101 = scmp.ne.s32.totalorder %s90, %s93
      %p102 = scmp.eq.s32.totalorder %s17, 1
      %p103 = por %p101, %p102
      %p104 = scmp.ne.s32.totalorder %s93, %s94
      %p105 = scmp.eq.s32.totalorder %s17, 0
      %p106 = por %p104, %p105
      %p107 = scmp.ne.s32.totalorder %s93, %s94
      %p108 = scmp.eq.s32.totalorder %s18, 1
      %p109 = por %p107, %p108
      %p111 = scmp.ne.s32.totalorder %s94, %s110
      %p112 = scmp.eq.s32.totalorder %s18, 0
      %p113 = por %p111, %p112
      %s114 = ssub.s32 %s12, %s19
      %p115 = scmp.eq.s32.totalorder %s114, 0
      %s117 = sadd.s32 %s116, 1
      %s118 = scalar_select %p115, %s116, %s117
      %p121 = pneg %p115
      %p122 = scmp.eq.s32.totalorder %s12, 1
      %p123 = por %p121, %p122
      %p124 = scmp.ne.s32.totalorder %s116, %s119
      %p125 = scmp.eq.s32.totalorder %s12, 0
      %p126 = por %p124, %p125
      %p127 = scmp.ne.s32.totalorder %s116, %s119
      %p128 = scmp.eq.s32.totalorder %s17, 1
      %p129 = por %p127, %p128
      %p130 = scmp.ne.s32.totalorder %s119, %s120
      %p131 = scmp.eq.s32.totalorder %s17, 0
      %p132 = por %p130, %p131
      %p133 = scmp.ne.s32.totalorder %s119, %s120
      %p134 = scmp.eq.s32.totalorder %s18, 1
      %p135 = por %p133, %p134
      %p137 = scmp.ne.s32.totalorder %s120, %s136
      %p138 = scmp.eq.s32.totalorder %s18, 0
      %p139 = por %p137, %p138
      %p140 = scmp.le.s32.totalorder 1, %s12
      %p141 = scmp.lt.s32.totalorder %s12, 3
      %p142 = pnand %p140, %p141
      %p143 = pneg %p142
      // Predicated region
      $region9: #{_vae_forward.1} parent=5 // pred_check
        _
      $region10: #{_vae_forward.1} parent=5 // pred_check_branch
        %145 = sbr.rel (%p142) target = $region12
      $region11: #{_vae_forward.1} parent=5 // pred_region
        %s146 = ssub.s32 %s12, 1
        // Predicated region
        $region13: #{_vae_forward.1} parent=11 // pred_check
          %p147 = pneg %p59
        $region14: #{_vae_forward.1} parent=11 // pred_check_branch
          %149 = sbr.rel (%p147) target = $region16
        $region15: #{_vae_forward.1} parent=11 // pred_region
          %151 = vsyncadd [#allocation3], 0
          %s152 = sshll.u32 %s1, 4
          %s153 = int_to_ptr.hbm [resolvable:$true] %s152
          %s154 = sshll.u32 [#allocation2], 4
          %s155 = int_to_ptr.vmem [resolvable:$true] %s154
          %160 = dma.hbm_to_vmem [thread:$0]  %s153, 24576, %s155, [#allocation3], 768, 768, 48
        $region16: #{_vae_forward.1} parent=11 // pred_fallthru
          _
        // Predicated region
        $region17: #{_vae_forward.1} parent=11 // pred_check
          %p161 = pneg %p80
        $region18: #{_vae_forward.1} parent=11 // pred_check_branch
          %163 = sbr.rel (%p161) target = $region20
        $region19: #{_vae_forward.1} parent=11 // pred_region
          _
        $region20: #{_vae_forward.1} parent=11 // pred_fallthru
          _
      $region12: #{_vae_forward.1} parent=5 // pred_fallthru
        _
      %p164 = scmp.lt.s32.totalorder %s12, 2
      // Predicated region
      $region21: #{_vae_forward.1} parent=5 // pred_check
        %p165 = pneg %p164
      $region22: #{_vae_forward.1} parent=5 // pred_check_branch
        %167 = sbr.rel (%p165) target = $region24
      $region23: #{_vae_forward.1} parent=5 // pred_region
        // Predicated region
        $region25: #{_vae_forward.1} parent=23 // pred_check
          %p168 = pneg %p32
        $region26: #{_vae_forward.1} parent=23 // pred_check_branch
          %170 = sbr.rel (%p168) target = $region28
        $region27: #{_vae_forward.1} parent=23 // pred_region
          %s171 = smul.u32 2, %s12
          %p172 = scmp.lt.s32.totalorder %s171, 3
          %s173 = scalar_select %p172, %s171, 3
          %s174 = smul.addr %s173, 4
          %s175 = scalar_lea.vmem %s0, %s174
          %s176 = smul.u32 2, %s12
        $region28: #{_vae_forward.1} parent=23 // pred_fallthru
          _
      $region24: #{_vae_forward.1} parent=5 // pred_fallthru
        _
      %p177 = scmp.le.s32.totalorder 1, %s12
      %p178 = scmp.lt.s32.totalorder %s12, 3
      %p179 = pnand %p177, %p178
      %p180 = pneg %p179
      // Predicated region
      $region29: #{_vae_forward.1} parent=5 // pred_check
        _
      $region30: #{_vae_forward.1} parent=5 // pred_check_branch
        %182 = sbr.rel (%p179) target = $region32
      $region31: #{_vae_forward.1} parent=5 // pred_region
        %s183 = ssub.s32 %s12, 1
        // Predicated region
        $region33: #{_vae_forward.1} parent=31 // pred_check
          %p184 = pneg %p59
        $region34: #{_vae_forward.1} parent=31 // pred_check_branch
          %186 = sbr.rel (%p184) target = $region36
        $region35: #{_vae_forward.1} parent=31 // pred_region
          %188 = dma.done [#allocation3], 24576
        $region36: #{_vae_forward.1} parent=31 // pred_fallthru
          _
        %s189 = smul.u32 2, %s17
        %p190 = scmp.lt.s32.totalorder %s189, 3
        %s191 = scalar_select %p190, %s189, 3
        %s192 = smul.addr %s191, 4
        %s193 = scalar_lea.vmem %s0, %s192
        %p194 = pneg %p38
        %p195 = pneg %p35
        %p196 = pneg %p59
        %p197 = pneg %p56
        %p198 = pneg %p80
        %p199 = pneg %p77
        %p200 = pneg %p106
        %p201 = pneg %p103
        %s202 = smul.u32 2, %s17
        %p203 = scmp.lt.s32.totalorder %s202, 3
        %s204 = scalar_select %p203, %s202, 3
        %s205 = smul.addr %s204, 8
        %s206 = scalar_lea.vmem %s3, %s205
        %p207 = pneg %p132
        %p208 = pneg %p129
        %p209 = scmp.lt.s32.totalorder %s17, 1
        %s210 = scalar_select %p209, %s17, 1
        %s211 = smul.addr %s210, 8
        %s212 = scalar_lea.vmem %s4, %s211
        %s213 = smul.u32 2, %s17
        %p214 = scmp.lt.s32.totalorder %s213, 3
        %s215 = scalar_select %p214, %s213, 3
        %s216 = smul.addr %s215, 4
        %s217 = scalar_lea.vmem %s0, %s216
        %s218 = smul.u32 2, %s17
        %s219 = smul.u32 2, %s17
        %p220 = scmp.lt.s32.totalorder %s219, 3
        %s221 = scalar_select %p220, %s219, 3
        %s222 = smul.addr %s221, 8
        %s223 = scalar_lea.vmem %s3, %s222
        %s224 = smul.u32 2, %s17
        %p225 = scmp.lt.s32.totalorder %s17, 1
        %s226 = scalar_select %p225, %s17, 1
        %s227 = smul.addr %s226, 8
        %s228 = scalar_lea.vmem %s4, %s227
        %v230 = vld [vmem:[%s217] sm:$0xf]
        %v231 = vld [vmem:[%s217 + $0x4] sm:$0xf]
        %v232 = vld [vmem:[#allocation2] sm:$0xff]
        %v233 = vld [vmem:[#allocation2 + $0x30] sm:$0xff]
        %v234 = vld [vmem:[#allocation2 + $0x60] sm:$0xff]
        %v235 = vld [vmem:[#allocation2 + $0x90] sm:$0xff]
        %v236 = vld [vmem:[%s2] sm:$0x3]
        %v238 = vperm.slane %v236, 0
        %v239 = vperm.slane %v236, 1
        %v244 = vunpack.c.l.b16 %v230
        %v245 = vunpack.c.l.b16 %v231
        %v246 = vpack.c.b16 %v245, %v244
        %v251 = vunpack.c.l.b16 %v232
        %v252 = vunpack.c.h.b16 %v232
        %v253 = vunpack.c.l.b16 %v233
        %v254 = vunpack.c.h.b16 %v233
        %v255 = vunpack.c.l.b16 %v234
        %v256 = vunpack.c.h.b16 %v234
        %v257 = vunpack.c.l.b16 %v235
        %v258 = vunpack.c.h.b16 %v235
        %v259 = vpack.c.b16 %v253, %v251
        %v260 = vpack.c.b16 %v254, %v252
        %v261 = vpack.c.b16 %v257, %v255
        %v262 = vpack.c.b16 %v258, %v256
        %vm267 = vcmask 261120
        %v269 = vsel %vm267, %v246, 0
        %271 = vmatpush.bf16.msra.mxu0 0
        %272 = vmatpush.bf16.msra.mxu0 0
        %273 = vmatpush.bf16.msra.mxu0 0
        %274 = vmatpush.bf16.msra.mxu0 0
        %275 = vmatpush.bf16.msra.mxu0 0
        %276 = vmatpush.bf16.msra.mxu0 0
        %277 = vmatpush.bf16.msra.mxu0 %v261
        %278 = vmatpush.bf16.msra.mxu0 %v259
        %279 = vmatmul.bf16.gmra.mxu0 %v269
        %v280 = vpop.f32.mrf.mxu0
        %v281 = vadd.f32 %v238, %v280
        %v282 = vpop.f32.mrf.mxu0
        %v283 = vadd.f32 %v238, %v282
        %284 = vdwg.mxu0
        %285 = vmatpush.bf16.msra.mxu0 0
        %286 = vmatpush.bf16.msra.mxu0 0
        %287 = vmatpush.bf16.msra.mxu0 0
        %288 = vmatpush.bf16.msra.mxu0 0
        %289 = vmatpush.bf16.msra.mxu0 0
        %290 = vmatpush.bf16.msra.mxu0 0
        %291 = vmatpush.bf16.msra.mxu0 %v262
        %292 = vmatpush.bf16.msra.mxu0 %v260
        %293 = vmatmul.bf16.gmra.mxu0 %v269
        %v294 = vpop.f32.mrf.mxu0
        %v295 = vadd.f32 %v239, %v294
        %v296 = vpop.f32.mrf.mxu0
        %v297 = vadd.f32 %v239, %v296
        %298 = vdwg.mxu0
        %v299 = vmul.f32 %v281, 0.01
        %v300 = vmul.f32 %v295, 0.01
        %v301 = vmul.f32 %v283, 0.01
        %v302 = vmul.f32 %v297, 0.01
        %v303 = vmax.f32 %v281, %v299
        %v304 = vmax.f32 %v295, %v300
        %v305 = vmax.f32 %v283, %v301
        %v306 = vmax.f32 %v297, %v302
        %v307 = vpack.c.bf16 %v305, %v303
        %v308 = vpack.c.bf16 %v306, %v304
        %v309 = vld [vmem:[#allocation2 + $0x8] sm:$0xf]
        %v310 = vld [vmem:[#allocation2 + $0x38] sm:$0xf]
        %v311 = vld [vmem:[#allocation2 + $0x68] sm:$0xf]
        %v312 = vld [vmem:[#allocation2 + $0x98] sm:$0xf]
        %v313 = vld [vmem:[#allocation2 + $0xc8] sm:$0xf]
        %v314 = vld [vmem:[#allocation2 + $0xf8] sm:$0xf]
        %v315 = vld [vmem:[#allocation2 + $0x128] sm:$0xf]
        %v316 = vld [vmem:[#allocation2 + $0x158] sm:$0xf]
        %v317 = vld [vmem:[#allocation2 + $0x188] sm:$0xf]
        %v318 = vld [vmem:[#allocation2 + $0x1b8] sm:$0xf]
        %v319 = vld [vmem:[#allocation2 + $0x1e8] sm:$0xf]
        %v320 = vld [vmem:[#allocation2 + $0x218] sm:$0xf]
        %v321 = vld [vmem:[#allocation2 + $0x248] sm:$0xf]
        %v322 = vld [vmem:[#allocation2 + $0x278] sm:$0xf]
        %v323 = vld [vmem:[#allocation2 + $0x2a8] sm:$0xf]
        %v324 = vld [vmem:[#allocation2 + $0x2d8] sm:$0xf]
        %v325 = vld [vmem:[#allocation2 + $0x308] sm:$0xf]
        %v326 = vld [vmem:[#allocation2 + $0x338] sm:$0xf]
        %v327 = vld [vmem:[#allocation2 + $0x368] sm:$0xf]
        %v328 = vld [vmem:[#allocation2 + $0x398] sm:$0xf]
        %v329 = vld [vmem:[#allocation2 + $0x3c8] sm:$0xf]
        %v330 = vld [vmem:[#allocation2 + $0x3f8] sm:$0xf]
        %v331 = vld [vmem:[#allocation2 + $0x428] sm:$0xf]
        %v332 = vld [vmem:[#allocation2 + $0x458] sm:$0xf]
        %v333 = vld [vmem:[#allocation2 + $0x488] sm:$0xf]
        %v334 = vld [vmem:[#allocation2 + $0x4b8] sm:$0xf]
        %v335 = vld [vmem:[#allocation2 + $0x4e8] sm:$0xf]
        %v336 = vld [vmem:[#allocation2 + $0x518] sm:$0xf]
        %v337 = vld [vmem:[#allocation2 + $0x548] sm:$0xf]
        %v338 = vld [vmem:[#allocation2 + $0x578] sm:$0xf]
        %v339 = vld [vmem:[#allocation2 + $0x5a8] sm:$0xf]
        %v340 = vld [vmem:[#allocation2 + $0x5d8] sm:$0xf]
        %v341 = vld [vmem:[%s2 + $0x2] sm:$0x1]
        %v343 = vperm.slane %v341, 0
        %v377 = vunpack.c.l.b16 %v309
        %v378 = vunpack.c.l.b16 %v310
        %v379 = vunpack.c.l.b16 %v311
        %v380 = vunpack.c.l.b16 %v312
        %v381 = vunpack.c.l.b16 %v313
        %v382 = vunpack.c.l.b16 %v314
        %v383 = vunpack.c.l.b16 %v315
        %v384 = vunpack.c.l.b16 %v316
        %v385 = vunpack.c.l.b16 %v317
        %v386 = vunpack.c.l.b16 %v318
        %v387 = vunpack.c.l.b16 %v319
        %v388 = vunpack.c.l.b16 %v320
        %v389 = vunpack.c.l.b16 %v321
        %v390 = vunpack.c.l.b16 %v322
        %v391 = vunpack.c.l.b16 %v323
        %v392 = vunpack.c.l.b16 %v324
        %v393 = vunpack.c.l.b16 %v325
        %v394 = vunpack.c.l.b16 %v326
        %v395 = vunpack.c.l.b16 %v327
        %v396 = vunpack.c.l.b16 %v328
        %v397 = vunpack.c.l.b16 %v329
        %v398 = vunpack.c.l.b16 %v330
        %v399 = vunpack.c.l.b16 %v331
        %v400 = vunpack.c.l.b16 %v332
        %v401 = vunpack.c.l.b16 %v333
        %v402 = vunpack.c.l.b16 %v334
        %v403 = vunpack.c.l.b16 %v335
        %v404 = vunpack.c.l.b16 %v336
        %v405 = vunpack.c.l.b16 %v337
        %v406 = vunpack.c.l.b16 %v338
        %v407 = vunpack.c.l.b16 %v339
        %v408 = vunpack.c.l.b16 %v340
        %v409 = vpack.c.b16 %v378, %v377
        %v410 = vpack.c.b16 %v380, %v379
        %v411 = vpack.c.b16 %v382, %v381
        %v412 = vpack.c.b16 %v384, %v383
        %v413 = vpack.c.b16 %v386, %v385
        %v414 = vpack.c.b16 %v388, %v387
        %v415 = vpack.c.b16 %v390, %v389
        %v416 = vpack.c.b16 %v392, %v391
        %v417 = vpack.c.b16 %v394, %v393
        %v418 = vpack.c.b16 %v396, %v395
        %v419 = vpack.c.b16 %v398, %v397
        %v420 = vpack.c.b16 %v400, %v399
        %v421 = vpack.c.b16 %v402, %v401
        %v422 = vpack.c.b16 %v404, %v403
        %v423 = vpack.c.b16 %v406, %v405
        %v424 = vpack.c.b16 %v408, %v407
        %441 = vmatpush.bf16.msra.mxu0 %v416
        %442 = vmatpush.bf16.msra.mxu0 %v415
        %443 = vmatpush.bf16.msra.mxu0 %v414
        %444 = vmatpush.bf16.msra.mxu0 %v413
        %445 = vmatpush.bf16.msra.mxu0 %v412
        %446 = vmatpush.bf16.msra.mxu0 %v411
        %447 = vmatpush.bf16.msra.mxu0 %v410
        %448 = vmatpush.bf16.msra.mxu0 %v409
        %449 = vmatmul.bf16.gmra.mxu0 %v307
        %v450 = vpop.f32.mrf.mxu0
        %v451 = vadd.f32 %v343, %v450
        %v452 = vpop.f32.mrf.mxu0
        %v453 = vadd.f32 %v343, %v452
        %454 = vdwg.mxu0
        %455 = vmatpush.bf16.msra.mxu0 %v424
        %456 = vmatpush.bf16.msra.mxu0 %v423
        %457 = vmatpush.bf16.msra.mxu0 %v422
        %458 = vmatpush.bf16.msra.mxu0 %v421
        %459 = vmatpush.bf16.msra.mxu0 %v420
        %460 = vmatpush.bf16.msra.mxu0 %v419
        %461 = vmatpush.bf16.msra.mxu0 %v418
        %462 = vmatpush.bf16.msra.mxu0 %v417
        %463 = vmatmul.bf16.gmra.mxu0 %v308
        %v464 = vpop.f32.mrf.mxu0
        %v465 = vadd.f32 %v451, %v464
        %v466 = vpop.f32.mrf.mxu0
        %v467 = vadd.f32 %v453, %v466
        %468 = vdwg.mxu0
        %v469 = vmul.f32 %v465, 0.01
        %v470 = vmul.f32 %v467, 0.01
        %v471 = vmax.f32 %v465, %v469
        %v472 = vmax.f32 %v467, %v470
        %v473 = vpack.c.bf16 %v472, %v471
        %v474 = vld [vmem:[#allocation2 + $0xc] sm:$0xf]
        %v475 = vld [vmem:[#allocation2 + $0x3c] sm:$0xf]
        %v476 = vld [vmem:[#allocation2 + $0x6c] sm:$0xf]
        %v477 = vld [vmem:[#allocation2 + $0x9c] sm:$0xf]
        %v478 = vld [vmem:[#allocation2 + $0xcc] sm:$0xf]
        %v479 = vld [vmem:[#allocation2 + $0xfc] sm:$0xf]
        %v480 = vld [vmem:[#allocation2 + $0x12c] sm:$0xf]
        %v481 = vld [vmem:[#allocation2 + $0x15c] sm:$0xf]
        %v482 = vld [vmem:[#allocation2 + $0x18c] sm:$0xf]
        %v483 = vld [vmem:[#allocation2 + $0x1bc] sm:$0xf]
        %v484 = vld [vmem:[#allocation2 + $0x1ec] sm:$0xf]
        %v485 = vld [vmem:[#allocation2 + $0x21c] sm:$0xf]
        %v486 = vld [vmem:[#allocation2 + $0x24c] sm:$0xf]
        %v487 = vld [vmem:[#allocation2 + $0x27c] sm:$0xf]
        %v488 = vld [vmem:[#allocation2 + $0x2ac] sm:$0xf]
        %v489 = vld [vmem:[#allocation2 + $0x2dc] sm:$0xf]
        %v490 = vld [vmem:[%s2 + $0x3] sm:$0x1]
        %v492 = vperm.slane %v490, 0
        %v510 = vunpack.c.l.b16 %v474
        %v511 = vunpack.c.l.b16 %v475
        %v512 = vunpack.c.l.b16 %v476
        %v513 = vunpack.c.l.b16 %v477
        %v514 = vunpack.c.l.b16 %v478
        %v515 = vunpack.c.l.b16 %v479
        %v516 = vunpack.c.l.b16 %v480
        %v517 = vunpack.c.l.b16 %v481
        %v518 = vunpack.c.l.b16 %v482
        %v519 = vunpack.c.l.b16 %v483
        %v520 = vunpack.c.l.b16 %v484
        %v521 = vunpack.c.l.b16 %v485
        %v522 = vunpack.c.l.b16 %v486
        %v523 = vunpack.c.l.b16 %v487
        %v524 = vunpack.c.l.b16 %v488
        %v525 = vunpack.c.l.b16 %v489
        %v526 = vpack.c.b16 %v511, %v510
        %v527 = vpack.c.b16 %v513, %v512
        %v528 = vpack.c.b16 %v515, %v514
        %v529 = vpack.c.b16 %v517, %v516
        %v530 = vpack.c.b16 %v519, %v518
        %v531 = vpack.c.b16 %v521, %v520
        %v532 = vpack.c.b16 %v523, %v522
        %v533 = vpack.c.b16 %v525, %v524
        %542 = vmatpush.bf16.msra.mxu0 %v533
        %543 = vmatpush.bf16.msra.mxu0 %v532
        %544 = vmatpush.bf16.msra.mxu0 %v531
        %545 = vmatpush.bf16.msra.mxu0 %v530
        %546 = vmatpush.bf16.msra.mxu0 %v529
        %547 = vmatpush.bf16.msra.mxu0 %v528
        %548 = vmatpush.bf16.msra.mxu0 %v527
        %549 = vmatpush.bf16.msra.mxu0 %v526
        %550 = vmatmul.bf16.gmra.mxu0 %v473
        %v551 = vpop.f32.mrf.mxu0
        %v552 = vadd.f32 %v492, %v551
        %v553 = vpop.f32.mrf.mxu0
        %v554 = vadd.f32 %v492, %v553
        %555 = vdwg.mxu0
        %v556 = vmul.f32 %v552, 0.01
        %v557 = vmul.f32 %v554, 0.01
        %v558 = vmax.f32 %v552, %v556
        %v559 = vmax.f32 %v554, %v557
        %v560 = vpack.c.bf16 %v559, %v558
        %v561 = vld [vmem:[#allocation2 + $0x10] sm:$0xf]
        %v562 = vld [vmem:[#allocation2 + $0x40] sm:$0xf]
        %v563 = vld [vmem:[#allocation2 + $0x70] sm:$0xf]
        %v564 = vld [vmem:[#allocation2 + $0xa0] sm:$0xf]
        %v565 = vld [vmem:[#allocation2 + $0xd0] sm:$0xf]
        %v566 = vld [vmem:[#allocation2 + $0x100] sm:$0xf]
        %v567 = vld [vmem:[#allocation2 + $0x130] sm:$0xf]
        %v568 = vld [vmem:[#allocation2 + $0x160] sm:$0xf]
        %v569 = vld [vmem:[%s2 + $0x4] sm:$0x1]
        %v571 = vperm.slane %v569, 0
        %v581 = vunpack.c.l.b16 %v561
        %v582 = vunpack.c.l.b16 %v562
        %v583 = vunpack.c.l.b16 %v563
        %v584 = vunpack.c.l.b16 %v564
        %v585 = vunpack.c.l.b16 %v565
        %v586 = vunpack.c.l.b16 %v566
        %v587 = vunpack.c.l.b16 %v567
        %v588 = vunpack.c.l.b16 %v568
        %v589 = vpack.c.b16 %v582, %v581
        %v590 = vpack.c.b16 %v584, %v583
        %v591 = vpack.c.b16 %v586, %v585
        %v592 = vpack.c.b16 %v588, %v587
        %vm597 = vcmask 523264
        %v599 = vsel %vm597, %v560, 0
        %601 = vmatpush.bf16.msra.mxu0 0
        %602 = vmatpush.bf16.msra.mxu0 0
        %603 = vmatpush.bf16.msra.mxu0 0
        %604 = vmatpush.bf16.msra.mxu0 0
        %605 = vmatpush.bf16.msra.mxu0 %v592
        %606 = vmatpush.bf16.msra.mxu0 %v591
        %607 = vmatpush.bf16.msra.mxu0 %v590
        %608 = vmatpush.bf16.msra.mxu0 %v589
        %609 = vmatmul.bf16.gmra.mxu0 %v599
        %v610 = vpop.f32.mrf.mxu0
        %v611 = vadd.f32 %v571, %v610
        %v612 = vpop.f32.mrf.mxu0
        %v613 = vadd.f32 %v571, %v612
        %614 = vdwg.mxu0
        %s615 = smul.u32 %s17, 16
        %v616 = vlaneseq
        %v617 = vshrl.u32 %v616, 7
        %v618 = vadd.s32 %v617, 8
        %v619 = vstv %s615
        %v620 = vadd.s32 %v619, %v617
        %v621 = vadd.s32 %v619, %v618
        %vm622 = vcmp.lt.s32.totalorder %v620, 32
        %vm623 = vcmp.lt.s32.totalorder %v621, 32
        %v624 = vsel %vm622, 1, 0
        %v625 = vsel %vm623, 1, 0
        %v626 = vcvt.s32.f32 %v624
        %v627 = vcvt.s32.f32 %v625
        %v628 = vadd.f32 %v611, 1.0
        %v629 = vadd.f32 %v613, 1.0
        %v630 = vmul.f32 %v611, %v611
        %v631 = vmul.f32 %v613, %v613
        %634 = vrot.lane.b32.xlu0 %v630, 8
        %v635 = vpop.permute.xlu0 %634
        %636 = vrot.lane.b32.xlu0 %v631, 8
        %v637 = vpop.permute.xlu0 %636
        %v640 = vsub.f32 %v628, %v635
        %v641 = vsub.f32 %v629, %v637
        %v642 = vmul.f32 %v611, 1.442695
        %v643 = vpow.pop %v642
        %v644 = vmul.f32 %v613, 1.442695
        %v645 = vpow.pop %v644
        %v646 = vsub.f32 %v640, %v643
        %v647 = vsub.f32 %v641, %v645
        %v648 = vmul.f32 %v626, %v646
        %v649 = vmul.f32 %v627, %v647
        %652 = vrot.lane.b32.xlu0 %v648, 120
        %v653 = vpop.permute.xlu0 %652
        %654 = vrot.lane.b32.xlu0 %v649, 120
        %v655 = vpop.permute.xlu0 %654
        %vm658 = vcmask 64512
        %v659 = vsel %vm658, %v653, 0.0
        %v660 = vsel %vm658, %v655, 0.0
        %v661 = vadd.f32 %v659, %v660
        %662 = vadd.xlane.f32.xlu0 %v661
        %v663 = vpop.xlane.xlu0 %662
        %v664 = vrot.slane %v663, 4
        %v665 = vadd.f32 %v663, %v664
        %v666 = vrot.slane %v665, 2
        %v667 = vadd.f32 %v665, %v666
        %v668 = vrot.slane %v667, 1
        %v669 = vadd.f32 %v667, %v668
        %s670 = vtos %v669
        %s671 = smul.f32 %s670, -0.5
        %v672 = vpack.c.bf16 %v613, %v611
        %v673 = vld [vmem:[#allocation2 + $0x14] sm:$0xf]
        %v674 = vld [vmem:[%s2 + $0x5] sm:$0x1]
        %v676 = vperm.slane %v674, 0
        %v679 = vsel %vm658, %v672, 0
        %vm681 = vcmask 1043456
        %v683 = vsel %vm681, %v673, 0
        %685 = vmatpush.bf16.msra.mxu0 0
        %686 = vmatpush.bf16.msra.mxu0 0
        %687 = vmatpush.bf16.msra.mxu0 0
        %688 = vmatpush.bf16.msra.mxu0 0
        %689 = vmatpush.bf16.msra.mxu0 0
        %690 = vmatpush.bf16.msra.mxu0 0
        %691 = vmatpush.bf16.msra.mxu0 0
        %692 = vmatpush.bf16.msra.mxu0 %v683
        %693 = vmatmul.bf16.gmra.mxu0 %v679
        %v694 = vpop.f32.mrf.mxu0
        %v695 = vadd.f32 %v676, %v694
        %v696 = vpop.f32.mrf.mxu0
        %v697 = vadd.f32 %v676, %v696
        %698 = vdwg.mxu0
        %v699 = vmul.f32 %v695, 0.01
        %v700 = vmul.f32 %v697, 0.01
        %v701 = vmax.f32 %v695, %v699
        %v702 = vmax.f32 %v697, %v700
        %v703 = vpack.c.bf16 %v702, %v701
        %v704 = vld [vmem:[#allocation2 + $0x18] sm:$0xf]
        %v705 = vld [vmem:[#allocation2 + $0x48] sm:$0xf]
        %v706 = vld [vmem:[%s2 + $0x6] sm:$0x1]
        %v708 = vperm.slane %v706, 0
        %v712 = vunpack.c.l.b16 %v704
        %v713 = vunpack.c.l.b16 %v705
        %v714 = vpack.c.b16 %v713, %v712
        %vm716 = vcmask 130048
        %v718 = vsel %vm716, %v703, 0
        %720 = vmatpush.bf16.msra.mxu0 0
        %721 = vmatpush.bf16.msra.mxu0 0
        %722 = vmatpush.bf16.msra.mxu0 0
        %723 = vmatpush.bf16.msra.mxu0 0
        %724 = vmatpush.bf16.msra.mxu0 0
        %725 = vmatpush.bf16.msra.mxu0 0
        %726 = vmatpush.bf16.msra.mxu0 0
        %727 = vmatpush.bf16.msra.mxu0 %v714
        %728 = vmatmul.bf16.gmra.mxu0 %v718
        %v729 = vpop.f32.mrf.mxu0
        %v730 = vadd.f32 %v708, %v729
        %v731 = vpop.f32.mrf.mxu0
        %v732 = vadd.f32 %v708, %v731
        %733 = vdwg.mxu0
        %v734 = vround.ne.pseudo %v730
        %v735 = vround.ne.pseudo %v732
        %v736 = vmul.f32 %v730, %v730
        %v737 = vmul.f32 %v732, %v732
        %v738 = vmul.f32 %v730, 2.0
        %v739 = vmul.f32 %v732, 2.0
        %v740 = vmul.f32 %v738, 1.442695
        %v741 = vpow.pop %v740
        %v742 = vmul.f32 %v739, 1.442695
        %v743 = vpow.pop %v742
        %746 = vrot.lane.b32.xlu0 %v741, 120
        %v747 = vpop.permute.xlu0 %746
        %748 = vrot.lane.b32.xlu0 %v743, 120
        %v749 = vpop.permute.xlu0 %748
        %v752 = vadd.f32 %v736, %v747
        %v753 = vadd.f32 %v737, %v749
        %v754 = vmul.f32 %v752, 0.5
        %v755 = vmul.f32 %v753, 0.5
        %758 = vrot.lane.b32.xlu0 %v730, 120
        %v759 = vpop.permute.xlu0 %758
        %760 = vrot.lane.b32.xlu0 %v732, 120
        %v761 = vpop.permute.xlu0 %760
        %v764 = vsub.f32 %v754, %v759
        %v765 = vsub.f32 %v755, %v761
        %v766 = vsub.f32 %v764, 0.5
        %v767 = vsub.f32 %v765, 0.5
        %v768 = vmul.f32 %v626, %v766
        %v769 = vmul.f32 %v627, %v767
        %v770 = vsel %vm658, %v768, 0.0
        %v771 = vsel %vm658, %v769, 0.0
        %v772 = vadd.f32 %v770, %v771
        %773 = vadd.xlane.f32.xlu0 %v772
        %v774 = vpop.xlane.xlu0 %773
        %v775 = vrot.slane %v774, 4
        %v776 = vadd.f32 %v774, %v775
        %v777 = vrot.slane %v776, 2
        %v778 = vadd.f32 %v776, %v777
        %v779 = vrot.slane %v778, 1
        %v780 = vadd.f32 %v778, %v779
        %s781 = vtos %v780
        %v782 = vpack.c.bf16 %v735, %v734
        %v783 = vld [vmem:[#allocation2 + $0x1c] sm:$0xf]
        %v784 = vld [vmem:[%s2 + $0x7] sm:$0x1]
        %v786 = vperm.slane %v784, 0
        %v789 = vsel %vm658, %v782, 0
        %v792 = vsel %vm681, %v783, 0
        %794 = vmatpush.bf16.msra.mxu0 0
        %795 = vmatpush.bf16.msra.mxu0 0
        %796 = vmatpush.bf16.msra.mxu0 0
        %797 = vmatpush.bf16.msra.mxu0 0
        %798 = vmatpush.bf16.msra.mxu0 0
        %799 = vmatpush.bf16.msra.mxu0 0
        %800 = vmatpush.bf16.msra.mxu0 0
        %801 = vmatpush.bf16.msra.mxu0 %v792
        %802 = vmatmul.bf16.gmra.mxu0 %v789
        %v803 = vpop.f32.mrf.mxu0
        %v804 = vadd.f32 %v786, %v803
        %v805 = vpop.f32.mrf.mxu0
        %v806 = vadd.f32 %v786, %v805
        %807 = vdwg.mxu0
        %v808 = vmul.f32 %v804, 0.01
        %v809 = vmul.f32 %v806, 0.01
        %v810 = vmax.f32 %v804, %v808
        %v811 = vmax.f32 %v806, %v809
        %v812 = vpack.c.bf16 %v811, %v810
        %v813 = vld [vmem:[#allocation2 + $0x20] sm:$0xf]
        %v814 = vld [vmem:[#allocation2 + $0x50] sm:$0xf]
        %v815 = vld [vmem:[#allocation2 + $0x80] sm:$0xf]
        %v816 = vld [vmem:[#allocation2 + $0xb0] sm:$0xf]
        %v817 = vld [vmem:[#allocation2 + $0xe0] sm:$0xf]
        %v818 = vld [vmem:[#allocation2 + $0x110] sm:$0xf]
        %v819 = vld [vmem:[#allocation2 + $0x140] sm:$0xf]
        %v820 = vld [vmem:[#allocation2 + $0x170] sm:$0xf]
        %v821 = vld [vmem:[%s2 + $0x8] sm:$0x1]
        %v823 = vperm.slane %v821, 0
        %v833 = vunpack.c.l.b16 %v813
        %v834 = vunpack.c.l.b16 %v814
        %v835 = vunpack.c.l.b16 %v815
        %v836 = vunpack.c.l.b16 %v816
        %v837 = vunpack.c.l.b16 %v817
        %v838 = vunpack.c.l.b16 %v818
        %v839 = vunpack.c.l.b16 %v819
        %v840 = vunpack.c.l.b16 %v820
        %v841 = vpack.c.b16 %v834, %v833
        %v842 = vpack.c.b16 %v836, %v835
        %v843 = vpack.c.b16 %v838, %v837
        %v844 = vpack.c.b16 %v840, %v839
        %v850 = vsel %vm597, %v812, 0
        %852 = vmatpush.bf16.msra.mxu0 0
        %853 = vmatpush.bf16.msra.mxu0 0
        %854 = vmatpush.bf16.msra.mxu0 0
        %855 = vmatpush.bf16.msra.mxu0 0
        %856 = vmatpush.bf16.msra.mxu0 %v844
        %857 = vmatpush.bf16.msra.mxu0 %v843
        %858 = vmatpush.bf16.msra.mxu0 %v842
        %859 = vmatpush.bf16.msra.mxu0 %v841
        %860 = vmatmul.bf16.gmra.mxu0 %v850
        %v861 = vpop.f32.mrf.mxu0
        %v862 = vadd.f32 %v823, %v861
        %v863 = vpop.f32.mrf.mxu0
        %v864 = vadd.f32 %v823, %v863
        %865 = vdwg.mxu0
        %v866 = vmul.f32 %v862, 0.01
        %v867 = vmul.f32 %v864, 0.01
        %v868 = vmax.f32 %v862, %v866
        %v869 = vmax.f32 %v864, %v867
        %v870 = vpack.c.bf16 %v869, %v868
        %v871 = vld [vmem:[#allocation2 + $0x24] sm:$0xff]
        %v872 = vld [vmem:[#allocation2 + $0x54] sm:$0xff]
        %v873 = vld [vmem:[#allocation2 + $0x84] sm:$0xff]
        %v874 = vld [vmem:[#allocation2 + $0xb4] sm:$0xff]
        %v875 = vld [vmem:[#allocation2 + $0xe4] sm:$0xff]
        %v876 = vld [vmem:[#allocation2 + $0x114] sm:$0xff]
        %v877 = vld [vmem:[#allocation2 + $0x144] sm:$0xff]
        %v878 = vld [vmem:[#allocation2 + $0x174] sm:$0xff]
        %v879 = vld [vmem:[#allocation2 + $0x1a4] sm:$0xff]
        %v880 = vld [vmem:[#allocation2 + $0x1d4] sm:$0xff]
        %v881 = vld [vmem:[#allocation2 + $0x204] sm:$0xff]
        %v882 = vld [vmem:[#allocation2 + $0x234] sm:$0xff]
        %v883 = vld [vmem:[#allocation2 + $0x264] sm:$0xff]
        %v884 = vld [vmem:[#allocation2 + $0x294] sm:$0xff]
        %v885 = vld [vmem:[#allocation2 + $0x2c4] sm:$0xff]
        %v886 = vld [vmem:[#allocation2 + $0x2f4] sm:$0xff]
        %v887 = vld [vmem:[%s2 + $0x9] sm:$0x3]
        %v889 = vperm.slane %v887, 0
        %v890 = vperm.slane %v887, 1
        %v909 = vunpack.c.l.b16 %v871
        %v910 = vunpack.c.h.b16 %v871
        %v911 = vunpack.c.l.b16 %v872
        %v912 = vunpack.c.h.b16 %v872
        %v913 = vunpack.c.l.b16 %v873
        %v914 = vunpack.c.h.b16 %v873
        %v915 = vunpack.c.l.b16 %v874
        %v916 = vunpack.c.h.b16 %v874
        %v917 = vunpack.c.l.b16 %v875
        %v918 = vunpack.c.h.b16 %v875
        %v919 = vunpack.c.l.b16 %v876
        %v920 = vunpack.c.h.b16 %v876
        %v921 = vunpack.c.l.b16 %v877
        %v922 = vunpack.c.h.b16 %v877
        %v923 = vunpack.c.l.b16 %v878
        %v924 = vunpack.c.h.b16 %v878
        %v925 = vunpack.c.l.b16 %v879
        %v926 = vunpack.c.h.b16 %v879
        %v927 = vunpack.c.l.b16 %v880
        %v928 = vunpack.c.h.b16 %v880
        %v929 = vunpack.c.l.b16 %v881
        %v930 = vunpack.c.h.b16 %v881
        %v931 = vunpack.c.l.b16 %v882
        %v932 = vunpack.c.h.b16 %v882
        %v933 = vunpack.c.l.b16 %v883
        %v934 = vunpack.c.h.b16 %v883
        %v935 = vunpack.c.l.b16 %v884
        %v936 = vunpack.c.h.b16 %v884
        %v937 = vunpack.c.l.b16 %v885
        %v938 = vunpack.c.h.b16 %v885
        %v939 = vunpack.c.l.b16 %v886
        %v940 = vunpack.c.h.b16 %v886
        %v941 = vpack.c.b16 %v911, %v909
        %v942 = vpack.c.b16 %v912, %v910
        %v943 = vpack.c.b16 %v915, %v913
        %v944 = vpack.c.b16 %v916, %v914
        %v945 = vpack.c.b16 %v919, %v917
        %v946 = vpack.c.b16 %v920, %v918
        %v947 = vpack.c.b16 %v923, %v921
        %v948 = vpack.c.b16 %v924, %v922
        %v949 = vpack.c.b16 %v927, %v925
        %v950 = vpack.c.b16 %v928, %v926
        %v951 = vpack.c.b16 %v931, %v929
        %v952 = vpack.c.b16 %v932, %v930
        %v953 = vpack.c.b16 %v935, %v933
        %v954 = vpack.c.b16 %v936, %v934
        %v955 = vpack.c.b16 %v939, %v937
        %v956 = vpack.c.b16 %v940, %v938
        %973 = vmatpush.bf16.msra.mxu0 %v955
        %974 = vmatpush.bf16.msra.mxu0 %v953
        %975 = vmatpush.bf16.msra.mxu0 %v951
        %976 = vmatpush.bf16.msra.mxu0 %v949
        %977 = vmatpush.bf16.msra.mxu0 %v947
        %978 = vmatpush.bf16.msra.mxu0 %v945
        %979 = vmatpush.bf16.msra.mxu0 %v943
        %980 = vmatpush.bf16.msra.mxu0 %v941
        %981 = vmatmul.bf16.gmra.mxu0 %v870
        %v982 = vpop.f32.mrf.mxu0
        %v983 = vadd.f32 %v889, %v982
        %v984 = vpop.f32.mrf.mxu0
        %v985 = vadd.f32 %v889, %v984
        %986 = vdwg.mxu0
        %987 = vmatpush.bf16.msra.mxu0 %v956
        %988 = vmatpush.bf16.msra.mxu0 %v954
        %989 = vmatpush.bf16.msra.mxu0 %v952
        %990 = vmatpush.bf16.msra.mxu0 %v950
        %991 = vmatpush.bf16.msra.mxu0 %v948
        %992 = vmatpush.bf16.msra.mxu0 %v946
        %993 = vmatpush.bf16.msra.mxu0 %v944
        %994 = vmatpush.bf16.msra.mxu0 %v942
        %995 = vmatmul.bf16.gmra.mxu0 %v870
        %v996 = vpop.f32.mrf.mxu0
        %v997 = vadd.f32 %v890, %v996
        %v998 = vpop.f32.mrf.mxu0
        %v999 = vadd.f32 %v890, %v998
        %1000 = vdwg.mxu0
        %v1001 = vmul.f32 %v983, 0.01
        %v1002 = vmul.f32 %v997, 0.01
        %v1003 = vmul.f32 %v985, 0.01
        %v1004 = vmul.f32 %v999, 0.01
        %v1005 = vmax.f32 %v983, %v1001
        %v1006 = vmax.f32 %v997, %v1002
        %v1007 = vmax.f32 %v985, %v1003
        %v1008 = vmax.f32 %v999, %v1004
        %v1009 = vpack.c.bf16 %v1007, %v1005
        %v1010 = vpack.c.bf16 %v1008, %v1006
        %v1011 = vld [vmem:[#allocation2 + $0x2c] sm:$0xf]
        %v1012 = vld [vmem:[#allocation2 + $0x5c] sm:$0xf]
        %v1013 = vld [vmem:[#allocation2 + $0x8c] sm:$0xf]
        %v1014 = vld [vmem:[#allocation2 + $0xbc] sm:$0xf]
        %v1015 = vld [vmem:[#allocation2 + $0xec] sm:$0xf]
        %v1016 = vld [vmem:[#allocation2 + $0x11c] sm:$0xf]
        %v1017 = vld [vmem:[#allocation2 + $0x14c] sm:$0xf]
        %v1018 = vld [vmem:[#allocation2 + $0x17c] sm:$0xf]
        %v1019 = vld [vmem:[#allocation2 + $0x1ac] sm:$0xf]
        %v1020 = vld [vmem:[#allocation2 + $0x1dc] sm:$0xf]
        %v1021 = vld [vmem:[#allocation2 + $0x20c] sm:$0xf]
        %v1022 = vld [vmem:[#allocation2 + $0x23c] sm:$0xf]
        %v1023 = vld [vmem:[#allocation2 + $0x26c] sm:$0xf]
        %v1024 = vld [vmem:[#allocation2 + $0x29c] sm:$0xf]
        %v1025 = vld [vmem:[#allocation2 + $0x2cc] sm:$0xf]
        %v1026 = vld [vmem:[#allocation2 + $0x2fc] sm:$0xf]
        %v1027 = vld [vmem:[#allocation2 + $0x32c] sm:$0xf]
        %v1028 = vld [vmem:[#allocation2 + $0x35c] sm:$0xf]
        %v1029 = vld [vmem:[#allocation2 + $0x38c] sm:$0xf]
        %v1030 = vld [vmem:[#allocation2 + $0x3bc] sm:$0xf]
        %v1031 = vld [vmem:[#allocation2 + $0x3ec] sm:$0xf]
        %v1032 = vld [vmem:[#allocation2 + $0x41c] sm:$0xf]
        %v1033 = vld [vmem:[#allocation2 + $0x44c] sm:$0xf]
        %v1034 = vld [vmem:[#allocation2 + $0x47c] sm:$0xf]
        %v1035 = vld [vmem:[#allocation2 + $0x4ac] sm:$0xf]
        %v1036 = vld [vmem:[#allocation2 + $0x4dc] sm:$0xf]
        %v1037 = vld [vmem:[#allocation2 + $0x50c] sm:$0xf]
        %v1038 = vld [vmem:[#allocation2 + $0x53c] sm:$0xf]
        %v1039 = vld [vmem:[#allocation2 + $0x56c] sm:$0xf]
        %v1040 = vld [vmem:[#allocation2 + $0x59c] sm:$0xf]
        %v1041 = vld [vmem:[#allocation2 + $0x5cc] sm:$0xf]
        %v1042 = vld [vmem:[#allocation2 + $0x5fc] sm:$0xf]
        %v1043 = vld [vmem:[%s2 + $0xb] sm:$0x1]
        %v1045 = vperm.slane %v1043, 0
        %v1079 = vunpack.c.l.b16 %v1011
        %v1080 = vunpack.c.l.b16 %v1012
        %v1081 = vunpack.c.l.b16 %v1013
        %v1082 = vunpack.c.l.b16 %v1014
        %v1083 = vunpack.c.l.b16 %v1015
        %v1084 = vunpack.c.l.b16 %v1016
        %v1085 = vunpack.c.l.b16 %v1017
        %v1086 = vunpack.c.l.b16 %v1018
        %v1087 = vunpack.c.l.b16 %v1019
        %v1088 = vunpack.c.l.b16 %v1020
        %v1089 = vunpack.c.l.b16 %v1021
        %v1090 = vunpack.c.l.b16 %v1022
        %v1091 = vunpack.c.l.b16 %v1023
        %v1092 = vunpack.c.l.b16 %v1024
        %v1093 = vunpack.c.l.b16 %v1025
        %v1094 = vunpack.c.l.b16 %v1026
        %v1095 = vunpack.c.l.b16 %v1027
        %v1096 = vunpack.c.l.b16 %v1028
        %v1097 = vunpack.c.l.b16 %v1029
        %v1098 = vunpack.c.l.b16 %v1030
        %v1099 = vunpack.c.l.b16 %v1031
        %v1100 = vunpack.c.l.b16 %v1032
        %v1101 = vunpack.c.l.b16 %v1033
        %v1102 = vunpack.c.l.b16 %v1034
        %v1103 = vunpack.c.l.b16 %v1035
        %v1104 = vunpack.c.l.b16 %v1036
        %v1105 = vunpack.c.l.b16 %v1037
        %v1106 = vunpack.c.l.b16 %v1038
        %v1107 = vunpack.c.l.b16 %v1039
        %v1108 = vunpack.c.l.b16 %v1040
        %v1109 = vunpack.c.l.b16 %v1041
        %v1110 = vunpack.c.l.b16 %v1042
        %v1111 = vpack.c.b16 %v1080, %v1079
        %v1112 = vpack.c.b16 %v1082, %v1081
        %v1113 = vpack.c.b16 %v1084, %v1083
        %v1114 = vpack.c.b16 %v1086, %v1085
        %v1115 = vpack.c.b16 %v1088, %v1087
        %v1116 = vpack.c.b16 %v1090, %v1089
        %v1117 = vpack.c.b16 %v1092, %v1091
        %v1118 = vpack.c.b16 %v1094, %v1093
        %v1119 = vpack.c.b16 %v1096, %v1095
        %v1120 = vpack.c.b16 %v1098, %v1097
        %v1121 = vpack.c.b16 %v1100, %v1099
        %v1122 = vpack.c.b16 %v1102, %v1101
        %v1123 = vpack.c.b16 %v1104, %v1103
        %v1124 = vpack.c.b16 %v1106, %v1105
        %v1125 = vpack.c.b16 %v1108, %v1107
        %v1126 = vpack.c.b16 %v1110, %v1109
        %1143 = vmatpush.bf16.msra.mxu0 %v1118
        %1144 = vmatpush.bf16.msra.mxu0 %v1117
        %1145 = vmatpush.bf16.msra.mxu0 %v1116
        %1146 = vmatpush.bf16.msra.mxu0 %v1115
        %1147 = vmatpush.bf16.msra.mxu0 %v1114
        %1148 = vmatpush.bf16.msra.mxu0 %v1113
        %1149 = vmatpush.bf16.msra.mxu0 %v1112
        %1150 = vmatpush.bf16.msra.mxu0 %v1111
        %1151 = vmatmul.bf16.gmra.mxu0 %v1009
        %v1152 = vpop.f32.mrf.mxu0
        %v1153 = vadd.f32 %v1045, %v1152
        %v1154 = vpop.f32.mrf.mxu0
        %v1155 = vadd.f32 %v1045, %v1154
        %1156 = vdwg.mxu0
        %1157 = vmatpush.bf16.msra.mxu0 %v1126
        %1158 = vmatpush.bf16.msra.mxu0 %v1125
        %1159 = vmatpush.bf16.msra.mxu0 %v1124
        %1160 = vmatpush.bf16.msra.mxu0 %v1123
        %1161 = vmatpush.bf16.msra.mxu0 %v1122
        %1162 = vmatpush.bf16.msra.mxu0 %v1121
        %1163 = vmatpush.bf16.msra.mxu0 %v1120
        %1164 = vmatpush.bf16.msra.mxu0 %v1119
        %1165 = vmatmul.bf16.gmra.mxu0 %v1010
        %v1166 = vpop.f32.mrf.mxu0
        %v1167 = vadd.f32 %v1153, %v1166
        %v1168 = vpop.f32.mrf.mxu0
        %v1169 = vadd.f32 %v1155, %v1168
        %1170 = vdwg.mxu0
        %1173 = vrot.lane.b32.xlu0 %v734, 16
        %v1174 = vpop.permute.xlu0 %1173
        %1175 = vrot.lane.b32.xlu0 %v735, 16
        %v1176 = vpop.permute.xlu0 %1175
        %1181 = vrot.lane.b32.xlu0 %v1167, 24
        %v1182 = vpop.permute.xlu0 %1181
        %1183 = vrot.lane.b32.xlu0 %v1169, 24
        %v1184 = vpop.permute.xlu0 %1183
        %v1187 = vsel %vm716, %v611, %v1174
        %v1188 = vsel %vm716, %v613, %v1176
        %vm1189 = vcmask 195584
        %v1190 = vsel %vm1189, %v1187, %v1182
        %v1191 = vsel %vm1189, %v1188, %v1184
        %vm1192 = vcmask 457728
        %v1193 = vsel %vm1192, %v1190, 0.0
        %v1194 = vsel %vm1192, %v1191, 0.0
        %1195 = vst [vmem:[%s223] sm:$0xff] %v1193
        %1196 = vst [vmem:[%s223 + $0x8] sm:$0xff] %v1194
        %v1197 = vlaneseq
        %v1198 = vand.u32 %v1197, 127
        %vm1199 = vcmp.eq.s32.totalorder %v1198, 0
        %vm1200 = vcmp.eq.s32.totalorder %v1198, 1
        %v1201 = vstv %s781
        %v1202 = vsel %vm1200, %v1201, 0.0
        %v1203 = vstv %s671
        %v1204 = vsel %vm1199, %v1203, %v1202
        %1205 = vst [vmem:[%s228] sm:$0xff] %v1204
        %s1206 = smul.u32 2, %s17
        %p1207 = scmp.lt.s32.totalorder %s1206, 3
        %s1208 = scalar_select %p1207, %s1206, 3
        %s1209 = smul.addr %s1208, 8
        %s1210 = scalar_lea.vmem %s3, %s1209
        %p1211 = scmp.lt.s32.totalorder %s17, 1
        %s1212 = scalar_select %p1211, %s17, 1
        %s1213 = smul.addr %s1212, 8
        %s1214 = scalar_lea.vmem %s4, %s1213
        // Predicated region
        $region37: #{_vae_forward.1} parent=31 // pred_check
          %p1215 = pneg %p103
        $region38: #{_vae_forward.1} parent=31 // pred_check_branch
          %1217 = sbr.rel (%p1215) target = $region40
        $region39: #{_vae_forward.1} parent=31 // pred_region
          %s1218 = smul.u32 2, %s17
        $region40: #{_vae_forward.1} parent=31 // pred_fallthru
          _
        // Predicated region
        $region41: #{_vae_forward.1} parent=31 // pred_check
          %p1219 = pneg %p129
        $region42: #{_vae_forward.1} parent=31 // pred_check_branch
          %1221 = sbr.rel (%p1219) target = $region44
        $region43: #{_vae_forward.1} parent=31 // pred_region
          _
        $region44: #{_vae_forward.1} parent=31 // pred_fallthru
          _
      $region32: #{_vae_forward.1} parent=5 // pred_fallthru
        _
      %p1222 = scmp.le.s32.totalorder 2, %s12
      // Predicated region
      $region45: #{_vae_forward.1} parent=5 // pred_check
        %p1223 = pneg %p1222
      $region46: #{_vae_forward.1} parent=5 // pred_check_branch
        %1225 = sbr.rel (%p1223) target = $region48
      $region47: #{_vae_forward.1} parent=5 // pred_region
        %s1226 = ssub.s32 %s12, 2
        // Predicated region
        $region49: #{_vae_forward.1} parent=47 // pred_check
          %p1227 = pneg %p109
        $region50: #{_vae_forward.1} parent=47 // pred_check_branch
          %1229 = sbr.rel (%p1227) target = $region52
        $region51: #{_vae_forward.1} parent=47 // pred_region
          %s1230 = smul.u32 2, %s18
          %p1231 = scmp.lt.s32.totalorder %s1230, 3
          %s1232 = scalar_select %p1231, %s1230, 3
          %s1233 = smul.addr %s1232, 8
          %s1234 = scalar_lea.vmem %s3, %s1233
        $region52: #{_vae_forward.1} parent=47 // pred_fallthru
          _
        // Predicated region
        $region53: #{_vae_forward.1} parent=47 // pred_check
          %p1235 = pneg %p135
        $region54: #{_vae_forward.1} parent=47 // pred_check_branch
          %1237 = sbr.rel (%p1235) target = $region56
        $region55: #{_vae_forward.1} parent=47 // pred_region
          %p1238 = scmp.lt.s32.totalorder %s18, 1
          %s1239 = scalar_select %p1238, %s18, 1
          %s1240 = smul.addr %s1239, 8
          %s1241 = scalar_lea.vmem %s4, %s1240
        $region56: #{_vae_forward.1} parent=47 // pred_fallthru
          _
      $region48: #{_vae_forward.1} parent=5 // pred_fallthru
        _
    $region6: #{_vae_forward.1} parent=1 // loop_footer
      %s16 = sadd.s32 1, %s12
    $region7: #{_vae_forward.1} parent=1 // loop_footer_branch
      %11 = sbr.rel target = $region3
    $region8: #{_vae_forward.1} parent=1 // loop_exit
      _
    %1242 = vsyncpa [#allocation3], 1
    %s1243 = scalar_lea.sflag [#allocation3], 1
    %1244 = vsyncpa %s1243, 1

</llo_original>
